<compile_context>
chip_gen: v6e
topology: v6e:2x2x1
jax: 0.10.0
libtpu: 0.0.40
codegen_flags: <defaults>
</compile_context>

<pallas_src>
import functools

import jax
import jax.numpy as jnp
from jax.experimental import pallas as pl
from jax.experimental.pallas import tpu as pltpu

_MIB = 1024 * 1024


def _vmem_capacity_bytes():
    """Per-core VMEM capacity, with a conservative (v7x) default."""
    try:
        cap = getattr(pltpu.get_tpu_info(), "vmem_capacity_bytes", None)
        if cap:
            return int(cap)
    except Exception:
        pass
    return 64 * _MIB


# ---------------------------------------------------------------------------
# Fused single-pass kernel: whole (C, HW) sample resident in VMEM.
# ---------------------------------------------------------------------------
def _scse_fused_kernel(x_ref, w1t_ref, w2_ref, wc_ref, o_ref, *, tho, inv_hw):
    # x_ref  : (1, C, HW) native dtype       o_ref : (1, C, HW)
    # w1t_ref: (C, ChPad) f32  (= w1.T, zero-padded along hidden)
    # w2_ref : (C, ChPad) f32  (zero-padded along hidden)
    # wc_ref : (C, 1)     f32  sSE 1x1-conv weights
    xf = x_ref[0].astype(jnp.float32)                                  # (C, HW)

    # --- cSE channel gate: mean over HW, then two tiny matvecs as VPU mul +
    #     XLU reduces (zero-padded hidden columns contribute exactly 0).
    pooled = jnp.sum(xf, axis=-1, keepdims=True) * inv_hw              # (C, 1)
    h = jnp.sum(w1t_ref[...] * pooled, axis=0, keepdims=True)          # (1, ChPad)
    h = jnp.maximum(h, 0.0)
    y = jax.nn.sigmoid(
        jnp.sum(w2_ref[...] * h, axis=-1, keepdims=True))              # (C, 1)

    # --- sSE branch: 1x1 conv C->1 == channel-weighted sum (VPU mul + XLU
    #     sublane reduce; keeps the MXU out of an M=1 matvec).
    s = jnp.sum(xf * wc_ref[...], axis=0, keepdims=True)               # (1, HW)

    # --- fused gate apply, f32 math, single cast at the store.
    gate = y + tho * jax.nn.sigmoid(s)                                 # (C, HW)
    o_ref[0] = (xf * gate).astype(o_ref.dtype)


# ---------------------------------------------------------------------------
# Streaming apply kernel (fallback when a sample does not fit VMEM).
# ---------------------------------------------------------------------------
def _scse_apply_kernel(x_ref, y_ref, wc_ref, o_ref, *, tho):
    # x_ref: (1, C, T)   y_ref: (1, C, 1) f32   wc_ref: (C, 1) f32
    xf = x_ref[0].astype(jnp.float32)                                  # (C, T)
    s = jnp.sum(xf * wc_ref[...], axis=0, keepdims=True)               # (1, T)
    gate = y_ref[0] + tho * jax.nn.sigmoid(s)                          # (C, T)
    o_ref[0] = (xf * gate).astype(o_ref.dtype)


def _pick_hw_tile(hw, c, f32_tile_cap_bytes):
    """Largest multiple of 128 whose (C, T) f32 working tile stays under cap."""
    t_cap = max(128, (f32_tile_cap_bytes // (4 * max(c, 1))) // 128 * 128)
    hw_pad = pl.cdiv(hw, 128) * 128
    return max(128, min(hw_pad, t_cap))


def scse_forward(x_nchw, w1, w2, w_conv, tho):
    """x_nchw: (B, C, H, W); w1: (C//re, C); w2: (C, C//re); w_conv: (1, C, 1, 1)."""
    B, C, H, W = x_nchw.shape
    HW = H * W
    itemsize = jnp.dtype(x_nchw.dtype).itemsize

    x = x_nchw.reshape(B, C, HW)                       # layout plumbing only
    wc = w_conv.reshape(C, 1).astype(jnp.float32)

    vmem_cap = _vmem_capacity_bytes()

    sample_native = C * HW * itemsize
    sample_f32 = C * HW * 4
    # in + out double-buffered (native) + ~3 full f32 temporaries (xf, gate, s).
    fused_need = 4 * sample_native + 3 * sample_f32 + 2 * _MIB
    use_fused = fused_need <= vmem_cap - 16 * _MIB

    if use_fused:
        # Zero-pad the tiny hidden dim up to a full lane tile; padded columns
        # contribute exactly 0 to h (and relu(0)=0 then *0 in w2), so the
        # result is unchanged.
        Ch = w1.shape[0]
        Ch_pad = max(128, pl.cdiv(Ch, 128) * 128)
        w1t = jnp.zeros((C, Ch_pad), jnp.float32).at[:, :Ch].set(
            w1.astype(jnp.float32).T)
        w2f = jnp.zeros((C, Ch_pad), jnp.float32).at[:, :Ch].set(
            w2.astype(jnp.float32))

        vmem_limit = int(min(vmem_cap - 8 * _MIB,
                             max(32 * _MIB, fused_need + 4 * _MIB)))
        cost = pl.CostEstimate(
            flops=int(7 * B * C * HW),
            transcendentals=int(B * (HW + C)),
            bytes_accessed=int(2 * B * C * HW * itemsize),
        )
        kernel = functools.partial(_scse_fused_kernel, tho=float(tho),
                                   inv_hw=1.0 / float(HW))
        out = pl.pallas_call(
            kernel,
            out_shape=jax.ShapeDtypeStruct((B, C, HW), x.dtype),
            grid_spec=pltpu.PrefetchScalarGridSpec(
                num_scalar_prefetch=0,
                grid=(B,),
                in_specs=[
                    pl.BlockSpec((1, C, HW), lambda b: (b, 0, 0)),
                    pl.BlockSpec((C, Ch_pad), lambda b: (0, 0)),
                    pl.BlockSpec((C, Ch_pad), lambda b: (0, 0)),
                    pl.BlockSpec((C, 1), lambda b: (0, 0)),
                ],
                out_specs=pl.BlockSpec((1, C, HW), lambda b: (b, 0, 0)),
            ),
            compiler_params=pltpu.CompilerParams(
                dimension_semantics=("parallel",),
                vmem_limit_bytes=vmem_limit,
            ),
            cost_estimate=cost,
        )(x, w1t, w2f, wc)
        return out.reshape(B, C, H, W)

    # ----- Streaming fallback: sample too large to keep resident ------------
    # cSE gate (tiny, full-HW reduction dependency) in plain JAX; the extra
    # HBM read is unavoidable here since the sample cannot stay in VMEM.
    pooled = jnp.mean(x.astype(jnp.float32), axis=-1)                  # (B, C)
    h = jnp.maximum(pooled @ w1.astype(jnp.float32).T, 0.0)            # (B, Ch)
    y = jax.nn.sigmoid(h @ w2.astype(jnp.float32).T)                   # (B, C)
    y = y.reshape(B, C, 1).astype(jnp.float32)

    # Bigger lane-dense tiles on 128 MiB parts (v5e/v6e), conservative on v7x.
    f32_tile_cap = 12 * _MIB if vmem_cap >= 96 * _MIB else 4 * _MIB
    T = _pick_hw_tile(HW, C, f32_tile_cap)
    grid = (B, pl.cdiv(HW, T))

    tile_need = 4 * C * T * itemsize + 3 * C * T * 4 + 2 * _MIB
    vmem_limit = int(min(vmem_cap - 8 * _MIB, max(32 * _MIB, tile_need)))

    cost = pl.CostEstimate(
        flops=int(5 * B * C * HW),
        transcendentals=int(B * HW),
        bytes_accessed=int(2 * B * C * HW * itemsize),
    )
    kernel = functools.partial(_scse_apply_kernel, tho=float(tho))
    out = pl.pallas_call(
        kernel,
        out_shape=jax.ShapeDtypeStruct((B, C, HW), x.dtype),
        grid_spec=pltpu.PrefetchScalarGridSpec(
            num_scalar_prefetch=0,
            grid=grid,
            in_specs=[
                pl.BlockSpec((1, C, T), lambda b, t: (b, 0, t)),
                pl.BlockSpec((1, C, 1), lambda b, t: (b, 0, 0)),
                pl.BlockSpec((C, 1), lambda b, t: (0, 0)),
            ],
            out_specs=pl.BlockSpec((1, C, T), lambda b, t: (b, 0, t)),
        ),
        compiler_params=pltpu.CompilerParams(
            dimension_semantics=("parallel", "parallel"),
            vmem_limit_bytes=vmem_limit,
        ),
        cost_estimate=cost,
    )(x, y, wc)
    return out.reshape(B, C, H, W)


def scse_reference(x, w1, w2, w_conv, tho):
    """Pure-JAX reference mirroring the PyTorch forward."""
    B, C, H, W = x.shape
    y = jnp.mean(x, axis=(2, 3))                                       # (B, C)
    y = jnp.maximum(y @ w1.T, 0.0)                                     # (B, Ch)
    y = jax.nn.sigmoid(y @ w2.T)                                       # (B, C)
    cse_out = x * y[:, :, None, None]
    s = jax.nn.sigmoid(jnp.einsum("oc,bchw->bohw", w_conv.reshape(1, C), x))
    sse_out = x * s
    return cse_out + sse_out * tho


if __name__ == "__main__":
    # Small shapes consistent with the module: need ch // re >= 1.
    B, C, H, W = 2, 32, 16, 16
    re = 16
    hidden = C // re
    tho = 0.5

    key = jax.random.PRNGKey(0)
    kx, k1, k2, kc = jax.random.split(key, 4)

    x = jax.random.normal(kx, (B, C, H, W), dtype=jnp.float32)
    # Deterministic synthetic parameters (shapes match the nn.Module __init__).
    w1 = jax.random.normal(k1, (hidden, C), dtype=jnp.float32) * 0.1       # Linear(ch, ch//re)
    w2 = jax.random.normal(k2, (C, hidden), dtype=jnp.float32) * 0.1       # Linear(ch//re, ch)
    w_conv = jax.random.normal(kc, (1, C, 1, 1), dtype=jnp.float32) * 0.1  # Conv2d(ch, 1, 1)

    out = scse_forward(x, w1, w2, w_conv, tho)
    out = jax.block_until_ready(out)

    ref = scse_reference(x, w1, w2, w_conv, tho)
    assert out.shape == (B, C, H, W)
    assert jnp.allclose(out, ref, atol=1e-5, rtol=1e-5)

    print("KERNEL_OK")
</pallas_src>

<mosaic_0001>
module attributes {stable_mosaic.version = 11 : i64} {
  func.func @_scse_fused_kernel(%arg0: i32, %arg1: memref<1x32x256xf32, #tpu.memory_space<vmem>>, %arg2: memref<32x128xf32, #tpu.memory_space<vmem>>, %arg3: memref<32x128xf32, #tpu.memory_space<vmem>>, %arg4: memref<32x1xf32, #tpu.memory_space<vmem>>, %arg5: memref<1x32x256xf32, #tpu.memory_space<vmem>>) attributes {dimension_semantics = [#tpu.dimension_semantics<parallel>], iteration_bounds = array<i64: 2>, scalar_prefetch = 0 : i64, scratch_operands = 0 : i64, tpu.core_type = #tpu.core_type<tc>, window_params = [{transform_indices = @transform_0, window_bounds = array<i64: 1, 32, 256>}, {pipeline_mode = #tpu.pipeline_mode<synchronous>, transform_indices = @transform_1, window_bounds = array<i64: 32, 128>}, {pipeline_mode = #tpu.pipeline_mode<synchronous>, transform_indices = @transform_2, window_bounds = array<i64: 32, 128>}, {pipeline_mode = #tpu.pipeline_mode<synchronous>, transform_indices = @transform_3, window_bounds = array<i64: 32, 1>}, {transform_indices = @transform_4, window_bounds = array<i64: 1, 32, 256>}]} {
    %c0 = arith.constant 0 : index
    %c0_0 = arith.constant 0 : index
    %c0_1 = arith.constant 0 : index
    %0 = vector.load %arg1[%c0, %c0_0, %c0_1] : memref<1x32x256xf32, #tpu.memory_space<vmem>>, vector<1x32x256xf32>
    %1 = vector.shape_cast %0 : vector<1x32x256xf32> to vector<32x256xf32>
    %cst = arith.constant dense<0.000000e+00> : vector<32xf32>
    %2 = vector.multi_reduction <add>, %1, %cst [1] : vector<32x256xf32> to vector<32xf32>
    %3 = vector.shape_cast %2 : vector<32xf32> to vector<32x1xf32>
    %cst_2 = arith.constant 3.906250e-03 : f32
    %4 = vector.broadcast %cst_2 : f32 to vector<32x1xf32>
    %5 = arith.mulf %3, %4 : vector<32x1xf32>
    %c0_3 = arith.constant 0 : index
    %c0_4 = arith.constant 0 : index
    %6 = vector.load %arg2[%c0_3, %c0_4] : memref<32x128xf32, #tpu.memory_space<vmem>>, vector<32x128xf32>
    %7 = vector.broadcast %5 : vector<32x1xf32> to vector<32x128xf32>
    %8 = arith.mulf %6, %7 : vector<32x128xf32>
    %cst_5 = arith.constant dense<0.000000e+00> : vector<128xf32>
    %9 = vector.multi_reduction <add>, %8, %cst_5 [0] : vector<32x128xf32> to vector<128xf32>
    %10 = vector.shape_cast %9 : vector<128xf32> to vector<1x128xf32>
    %cst_6 = arith.constant 0.000000e+00 : f32
    %11 = vector.broadcast %cst_6 : f32 to vector<1x128xf32>
    %12 = arith.maximumf %10, %11 : vector<1x128xf32>
    %c0_7 = arith.constant 0 : index
    %c0_8 = arith.constant 0 : index
    %13 = vector.load %arg3[%c0_7, %c0_8] : memref<32x128xf32, #tpu.memory_space<vmem>>, vector<32x128xf32>
    %14 = vector.broadcast %12 : vector<1x128xf32> to vector<32x128xf32>
    %15 = arith.mulf %13, %14 : vector<32x128xf32>
    %cst_9 = arith.constant dense<0.000000e+00> : vector<32xf32>
    %16 = vector.multi_reduction <add>, %15, %cst_9 [1] : vector<32x128xf32> to vector<32xf32>
    %17 = vector.shape_cast %16 : vector<32xf32> to vector<32x1xf32>
    %18 = arith.negf %17 : vector<32x1xf32>
    %19 = math.exp %18 : vector<32x1xf32>
    %cst_10 = arith.constant 1.000000e+00 : f32
    %20 = vector.broadcast %cst_10 : f32 to vector<32x1xf32>
    %21 = arith.addf %20, %19 : vector<32x1xf32>
    %22 = arith.divf %20, %21 : vector<32x1xf32>
    %c0_11 = arith.constant 0 : index
    %c0_12 = arith.constant 0 : index
    %23 = vector.load %arg4[%c0_11, %c0_12] : memref<32x1xf32, #tpu.memory_space<vmem>>, vector<32x1xf32>
    %24 = vector.broadcast %23 : vector<32x1xf32> to vector<32x256xf32>
    %25 = arith.mulf %1, %24 : vector<32x256xf32>
    %cst_13 = arith.constant dense<0.000000e+00> : vector<256xf32>
    %26 = vector.multi_reduction <add>, %25, %cst_13 [0] : vector<32x256xf32> to vector<256xf32>
    %27 = vector.shape_cast %26 : vector<256xf32> to vector<1x256xf32>
    %28 = arith.negf %27 : vector<1x256xf32>
    %29 = math.exp %28 : vector<1x256xf32>
    %cst_14 = arith.constant 1.000000e+00 : f32
    %30 = vector.broadcast %cst_14 : f32 to vector<1x256xf32>
    %31 = arith.addf %30, %29 : vector<1x256xf32>
    %32 = arith.divf %30, %31 : vector<1x256xf32>
    %cst_15 = arith.constant 5.000000e-01 : f32
    %33 = vector.broadcast %cst_15 : f32 to vector<1x256xf32>
    %34 = arith.mulf %33, %32 : vector<1x256xf32>
    %35 = vector.broadcast %22 : vector<32x1xf32> to vector<32x256xf32>
    %36 = vector.broadcast %34 : vector<1x256xf32> to vector<32x256xf32>
    %37 = arith.addf %35, %36 : vector<32x256xf32>
    %38 = arith.mulf %1, %37 : vector<32x256xf32>
    %c0_16 = arith.constant 0 : index
    %c0_17 = arith.constant 0 : index
    %c0_18 = arith.constant 0 : index
    %39 = vector.load %arg5[%c0_16, %c0_17, %c0_18] : memref<1x32x256xf32, #tpu.memory_space<vmem>>, vector<1x32x256xf32>
    %40 = vector.shape_cast %39 : vector<1x32x256xf32> to vector<32x256xf32>
    %41 = vector.shape_cast %38 : vector<32x256xf32> to vector<1x32x256xf32>
    tpu.vector_store %arg5[%c0_16, %c0_17, %c0_18], %41 {strides = array<i32>} : memref<1x32x256xf32, #tpu.memory_space<vmem>>, vector<1x32x256xf32>,
    return
  }
  func.func @transform_0(%arg0: i32) -> (i32, i32, i32) {
    %c0_i32 = arith.constant 0 : i32
    %c0_i32_0 = arith.constant 0 : i32
    %c0_i32_1 = arith.constant 0 : i32
    return %arg0, %c0_i32, %c0_i32_0 : i32, i32, i32
  }
  func.func @transform_1(%arg0: i32) -> (i32, i32) {
    %c0_i32 = arith.constant 0 : i32
    %c0_i32_0 = arith.constant 0 : i32
    %c0_i32_1 = arith.constant 0 : i32
    return %c0_i32, %c0_i32_0 : i32, i32
  }
  func.func @transform_2(%arg0: i32) -> (i32, i32) {
    %c0_i32 = arith.constant 0 : i32
    %c0_i32_0 = arith.constant 0 : i32
    %c0_i32_1 = arith.constant 0 : i32
    return %c0_i32, %c0_i32_0 : i32, i32
  }
  func.func @transform_3(%arg0: i32) -> (i32, i32) {
    %c0_i32 = arith.constant 0 : i32
    %c0_i32_0 = arith.constant 0 : i32
    %c0_i32_1 = arith.constant 0 : i32
    return %c0_i32, %c0_i32_0 : i32, i32
  }
  func.func @transform_4(%arg0: i32) -> (i32, i32, i32) {
    %c0_i32 = arith.constant 0 : i32
    %c0_i32_0 = arith.constant 0 : i32
    %c0_i32_1 = arith.constant 0 : i32
    return %arg0, %c0_i32, %c0_i32_0 : i32, i32, i32
  }
}

</mosaic_0001>

<llo_original>
// kernel: tpu_custom_call.1
$region0: #{tpu_custom_call.1}
  #allocation0 [shape = 'u32[]', space=smem, size = 0x4, offset = 0x4, fixed_abs, tag = 'smem constant byte address 0x4 - core index']
  #allocation1 [shape = 'u32[144,128]{1,0:T(1,128)}', space=vmem, size = 0x12000, scoped, tag = 'internal scratch']
  %s0 = inlined_call_operand.hbm [shape: f32[2,32,256], index: 0, kind: input, shape index: {}]
  %s1 = inlined_call_operand.vmem [shape: f32[32,128], index: 1, kind: input, shape index: {}]
  %s2 = inlined_call_operand.hbm [shape: f32[32,128], index: 2, kind: input, shape index: {}]
  %s3 = inlined_call_operand.vmem [shape: f32[32,1], index: 3, kind: input, shape index: {}]
  %s4 = inlined_call_operand.hbm [shape: f32[2,32,256], index: 4, kind: output, shape index: {}]
  %s5 = sld [smem:[#allocation0]]
  $region57: #{tpu_custom_call.1} parent=0
    _
  %s7 = ssub.s32 1, %s5
  %s8 = scalar_select 0, %s7, %s5
  $region1: #{tpu_custom_call.1} parent=0
    #allocation2 [shape = 'u8[65536]{0}', space=vmem, size = 0x10000, scoped, tag = 'input window, operand 0']
    #allocation3 [shape = 's32[2]{0}', space=sflag, size = 0x8, scoped, tag = 'scoped memory for tpu_custom_call.1']
    #allocation4 [shape = 's32[2]{0}', space=sflag, size = 0x8, scoped, tag = 'scoped memory for tpu_custom_call.1']
    #allocation5 [shape = 'u8[16384]{0}', space=vmem, size = 0x4000, scoped, tag = 'input window, operand 2, single buffered']
    #allocation6 [shape = 's32[1]{0}', space=sflag, size = 0x4, scoped, tag = 'scoped memory for tpu_custom_call.1']
    #allocation7 [shape = 'u8[65536]{0}', space=vmem, size = 0x10000, scoped, tag = 'output window, operand 0']
    %9 = vsyncpa [#allocation3], 0
    %s10 = scalar_lea.sflag [#allocation3], 1
    %11 = vsyncpa %s10, 0
    %12 = vsyncpa [#allocation6], 0
    %13 = vsyncpa [#allocation4], 0
    %s14 = scalar_lea.sflag [#allocation4], 1
    %15 = vsyncpa %s14, 0
    loop: start=0, step=1, limit=4
    $region2: #{tpu_custom_call.1} parent=1 // loop_pre_header
      _
    $region3: #{tpu_custom_call.1} parent=1 // loop_header
      %s17 = sphi 0, %s21
      %p18 = scmp.ge.s32.totalorder %s17, 4
      %s27 = sphi 0, %s29
      %s30 = sphi 0, %s27
      %s31 = sphi 0, %s30
      %s47 = sphi 0, %s31
      %s51 = sphi 0, %s51
      %s53 = sphi 0, %s51
      %s54 = sphi 0, %s53
      %s68 = sphi 0, %s54
      %s72 = sphi 0, %s72
      %s74 = sphi 0, %s72
      %s75 = sphi 0, %s74
      %s89 = sphi 0, %s75
      %s93 = sphi 0, %s93
      %s95 = sphi 0, %s93
      %s96 = sphi 0, %s95
      %s110 = sphi 0, %s96
      %s116 = sphi 0, %s118
      %s119 = sphi 0, %s116
      %s120 = sphi 0, %s119
      %s136 = sphi 0, %s120
    $region4: #{tpu_custom_call.1} parent=1 // loop_header_branch
      %20 = sbr.rel (%p18) target = $region8
    $region5: #{tpu_custom_call.1} parent=1 // loop_body
      %s22 = ssub.s32 %s17, 1
      %s23 = ssub.s32 %s17, 2
      %s24 = sadd.s32 %s17, 1
      %s25 = ssub.s32 %s17, %s24
      %p26 = scmp.eq.s32.totalorder %s25, 0
      %s28 = sadd.s32 %s27, 1
      %s29 = scalar_select %p26, %s27, %s28
      %p32 = pneg %p26
      %p33 = scmp.eq.s32.totalorder %s17, 1
      %p34 = por %p32, %p33
      %p35 = scmp.ne.s32.totalorder %s27, %s30
      %p36 = scmp.eq.s32.totalorder %s17, 0
      %p37 = por %p35, %p36
      %p38 = scmp.ne.s32.totalorder %s27, %s30
      %p39 = scmp.eq.s32.totalorder %s22, 1
      %p40 = por %p38, %p39
      %p41 = scmp.ne.s32.totalorder %s30, %s31
      %p42 = scmp.eq.s32.totalorder %s22, 0
      %p43 = por %p41, %p42
      %p44 = scmp.ne.s32.totalorder %s30, %s31
      %p45 = scmp.eq.s32.totalorder %s23, 1
      %p46 = por %p44, %p45
      %p48 = scmp.ne.s32.totalorder %s31, %s47
      %p49 = scmp.eq.s32.totalorder %s23, 0
      %p50 = por %p48, %p49
      %s52 = sadd.s32 %s51, 1
      %p55 = scmp.eq.s32.totalorder %s17, 1
      %p56 = scmp.ne.s32.totalorder %s51, %s53
      %p57 = scmp.eq.s32.totalorder %s17, 0
      %p58 = por %p56, %p57
      %p59 = scmp.ne.s32.totalorder %s51, %s53
      %p60 = scmp.eq.s32.totalorder %s22, 1
      %p61 = por %p59, %p60
      %p62 = scmp.ne.s32.totalorder %s53, %s54
      %p63 = scmp.eq.s32.totalorder %s22, 0
      %p64 = por %p62, %p63
      %p65 = scmp.ne.s32.totalorder %s53, %s54
      %p66 = scmp.eq.s32.totalorder %s23, 1
      %p67 = por %p65, %p66
      %p69 = scmp.ne.s32.totalorder %s54, %s68
      %p70 = scmp.eq.s32.totalorder %s23, 0
      %p71 = por %p69, %p70
      %s73 = sadd.s32 %s72, 1
      %p76 = scmp.eq.s32.totalorder %s17, 1
      %p77 = scmp.ne.s32.totalorder %s72, %s74
      %p78 = scmp.eq.s32.totalorder %s17, 0
      %p79 = por %p77, %p78
      %p80 = scmp.ne.s32.totalorder %s72, %s74
      %p81 = scmp.eq.s32.totalorder %s22, 1
      %p82 = por %p80, %p81
      %p83 = scmp.ne.s32.totalorder %s74, %s75
      %p84 = scmp.eq.s32.totalorder %s22, 0
      %p85 = por %p83, %p84
      %p86 = scmp.ne.s32.totalorder %s74, %s75
      %p87 = scmp.eq.s32.totalorder %s23, 1
      %p88 = por %p86, %p87
      %p90 = scmp.ne.s32.totalorder %s75, %s89
      %p91 = scmp.eq.s32.totalorder %s23, 0
      %p92 = por %p90, %p91
      %s94 = sadd.s32 %s93, 1
      %p97 = scmp.eq.s32.totalorder %s17, 1
      %p98 = scmp.ne.s32.totalorder %s93, %s95
      %p99 = scmp.eq.s32.totalorder %s17, 0
      %p100 = por %p98, %p99
      %p101 = scmp.ne.s32.totalorder %s93, %s95
      %p102 = scmp.eq.s32.totalorder %s22, 1
      %p103 = por %p101, %p102
      %p104 = scmp.ne.s32.totalorder %s95, %s96
      %p105 = scmp.eq.s32.totalorder %s22, 0
      %p106 = por %p104, %p105
      %p107 = scmp.ne.s32.totalorder %s95, %s96
      %p108 = scmp.eq.s32.totalorder %s23, 1
      %p109 = por %p107, %p108
      %p111 = scmp.ne.s32.totalorder %s96, %s110
      %p112 = scmp.eq.s32.totalorder %s23, 0
      %p113 = por %p111, %p112
      %s114 = ssub.s32 %s17, %s24
      %p115 = scmp.eq.s32.totalorder %s114, 0
      %s117 = sadd.s32 %s116, 1
      %s118 = scalar_select %p115, %s116, %s117
      %p121 = pneg %p115
      %p122 = scmp.eq.s32.totalorder %s17, 1
      %p123 = por %p121, %p122
      %p124 = scmp.ne.s32.totalorder %s116, %s119
      %p125 = scmp.eq.s32.totalorder %s17, 0
      %p126 = por %p124, %p125
      %p127 = scmp.ne.s32.totalorder %s116, %s119
      %p128 = scmp.eq.s32.totalorder %s22, 1
      %p129 = por %p127, %p128
      %p130 = scmp.ne.s32.totalorder %s119, %s120
      %p131 = scmp.eq.s32.totalorder %s22, 0
      %p132 = por %p130, %p131
      %p133 = scmp.ne.s32.totalorder %s119, %s120
      %p134 = scmp.eq.s32.totalorder %s23, 1
      %p135 = por %p133, %p134
      %p137 = scmp.ne.s32.totalorder %s120, %s136
      %p138 = scmp.eq.s32.totalorder %s23, 0
      %p139 = por %p137, %p138
      %p140 = scmp.le.s32.totalorder 1, %s17
      %p141 = scmp.lt.s32.totalorder %s17, 3
      %p142 = pnand %p140, %p141
      %p143 = pneg %p142
      // Predicated region
      $region9: #{tpu_custom_call.1} parent=5 // pred_check
        _
      $region10: #{tpu_custom_call.1} parent=5 // pred_check_branch
        %145 = sbr.rel (%p142) target = $region12
      $region11: #{tpu_custom_call.1} parent=5 // pred_region
        %s146 = ssub.s32 %s17, 1
        // Predicated region
        $region13: #{tpu_custom_call.1} parent=11 // pred_check
          %p147 = pneg %p64
        $region14: #{tpu_custom_call.1} parent=11 // pred_check_branch
          %149 = sbr.rel (%p147) target = $region16
        $region15: #{tpu_custom_call.1} parent=11 // pred_region
          _
        $region16: #{tpu_custom_call.1} parent=11 // pred_fallthru
          _
        // Predicated region
        $region17: #{tpu_custom_call.1} parent=11 // pred_check
          %p150 = pneg %p85
        $region18: #{tpu_custom_call.1} parent=11 // pred_check_branch
          %152 = sbr.rel (%p150) target = $region20
        $region19: #{tpu_custom_call.1} parent=11 // pred_region
          %s154 = ssub.s32 512, 512
          %155 = vsyncadd [#allocation6], %s154
          %s156 = sshll.u32 [#allocation5], 4
          %s157 = int_to_ptr.vmem [resolvable:$true] %s156
          %162 = dma.hbm_to_vmem [thread:$0]  %s2, 512, %s157, [#allocation6], 128, 128, 8
        $region20: #{tpu_custom_call.1} parent=11 // pred_fallthru
          _
        // Predicated region
        $region21: #{tpu_custom_call.1} parent=11 // pred_check
          %p163 = pneg %p106
        $region22: #{tpu_custom_call.1} parent=11 // pred_check_branch
          %165 = sbr.rel (%p163) target = $region24
        $region23: #{tpu_custom_call.1} parent=11 // pred_region
          _
        $region24: #{tpu_custom_call.1} parent=11 // pred_fallthru
          _
      $region12: #{tpu_custom_call.1} parent=5 // pred_fallthru
        _
      %p166 = scmp.lt.s32.totalorder %s17, 2
      // Predicated region
      $region25: #{tpu_custom_call.1} parent=5 // pred_check
        %p167 = pneg %p166
      $region26: #{tpu_custom_call.1} parent=5 // pred_check_branch
        %169 = sbr.rel (%p167) target = $region28
      $region27: #{tpu_custom_call.1} parent=5 // pred_region
        // Predicated region
        $region29: #{tpu_custom_call.1} parent=27 // pred_check
          %p170 = pneg %p37
        $region30: #{tpu_custom_call.1} parent=27 // pred_check_branch
          %172 = sbr.rel (%p170) target = $region32
        $region31: #{tpu_custom_call.1} parent=27 // pred_region
          %s173 = sand.u32 %s27, 1
          %s174 = scalar_lea.sflag [#allocation3], %s173
          %s175 = sand.u32 %s27, 1
          %s176 = smul.addr %s175, 64
          %s177 = scalar_lea.vmem [#allocation2], %s176
          %s179 = ssub.s32 1024, 1024
          %180 = vsyncadd %s174, %s179
          %s181 = smul.addr %s17, 8
          %s182 = smul.addr %s181, 128
          %s183 = scalar_lea.hbm %s0, %s182
          %s184 = sshll.u32 %s177, 4
          %s185 = int_to_ptr.vmem [resolvable:$true] %s184
          %190 = dma.hbm_to_vmem [thread:$0]  %s183, 1024, %s185, %s174, 256, 256, 16
        $region32: #{tpu_custom_call.1} parent=27 // pred_fallthru
          _
      $region28: #{tpu_custom_call.1} parent=5 // pred_fallthru
        _
      %p191 = scmp.le.s32.totalorder 1, %s17
      %p192 = scmp.lt.s32.totalorder %s17, 3
      %p193 = pnand %p191, %p192
      %p194 = pneg %p193
      // Predicated region
      $region33: #{tpu_custom_call.1} parent=5 // pred_check
        _
      $region34: #{tpu_custom_call.1} parent=5 // pred_check_branch
        %196 = sbr.rel (%p193) target = $region36
      $region35: #{tpu_custom_call.1} parent=5 // pred_region
        %s197 = ssub.s32 %s17, 1
        %s198 = sand.u32 %s30, 1
        %s199 = scalar_lea.sflag [#allocation3], %s198
        %s200 = sand.u32 %s30, 1
        %s201 = smul.addr %s200, 64
        %s202 = scalar_lea.vmem [#allocation2], %s201
        // Predicated region
        $region37: #{tpu_custom_call.1} parent=35 // pred_check
          %p203 = pneg %p43
        $region38: #{tpu_custom_call.1} parent=35 // pred_check_branch
          %205 = sbr.rel (%p203) target = $region40
        $region39: #{tpu_custom_call.1} parent=35 // pred_region
          %206 = dma.done %s199, 1024
        $region40: #{tpu_custom_call.1} parent=35 // pred_fallthru
          _
        // Predicated region
        $region41: #{tpu_custom_call.1} parent=35 // pred_check
          %p207 = pneg %p85
        $region42: #{tpu_custom_call.1} parent=35 // pred_check_branch
          %209 = sbr.rel (%p207) target = $region44
        $region43: #{tpu_custom_call.1} parent=35 // pred_region
          %210 = dma.done [#allocation6], 512
        $region44: #{tpu_custom_call.1} parent=35 // pred_fallthru
          _
        %s211 = sand.u32 %s30, 1
        %s212 = scalar_lea.sflag [#allocation3], %s211
        %s213 = sand.u32 %s30, 1
        %s214 = smul.addr %s213, 64
        %s215 = scalar_lea.vmem [#allocation2], %s214
        %p216 = pneg %p43
        %p217 = pneg %p40
        %p218 = pneg %p64
        %p219 = pneg %p61
        %p220 = pneg %p85
        %p221 = pneg %p82
        %p222 = pneg %p106
        %p223 = pneg %p103
        %p224 = pneg %p132
        %p225 = pneg %p129
        %s226 = sand.u32 %s119, 1
        %s227 = scalar_lea.sflag [#allocation4], %s226
        %s228 = sand.u32 %s119, 1
        %s229 = smul.addr %s228, 64
        %s230 = scalar_lea.vmem [#allocation7], %s229
        %v231 = vld [vmem:[%s202] sm:$0xff]
        %v232 = vld [vmem:[%s202 + $0x8] sm:$0xff]
        %v233 = vld [vmem:[%s202 + $0x10] sm:$0xff]
        %v234 = vld [vmem:[%s202 + $0x18] sm:$0xff]
        %v235 = vld [vmem:[%s202 + $0x20] sm:$0xff]
        %v236 = vld [vmem:[%s202 + $0x28] sm:$0xff]
        %v237 = vld [vmem:[%s202 + $0x30] sm:$0xff]
        %v238 = vld [vmem:[%s202 + $0x38] sm:$0xff]
        %v239 = vadd.f32 %v231, %v232
        %240 = vadd.xlane.f32.xlu0 %v239
        %v241 = vpop.xlane.xlu0 %240
        %v242 = vadd.f32 %v233, %v234
        %243 = vadd.xlane.f32.xlu0 %v242
        %v244 = vpop.xlane.xlu0 %243
        %v245 = vadd.f32 %v235, %v236
        %246 = vadd.xlane.f32.xlu0 %v245
        %v247 = vpop.xlane.xlu0 %246
        %v248 = vadd.f32 %v237, %v238
        %249 = vadd.xlane.f32.xlu0 %v248
        %v250 = vpop.xlane.xlu0 %249
        %v251 = vmul.f32 %v241, 0.00390625
        %v252 = vmul.f32 %v244, 0.00390625
        %v253 = vmul.f32 %v247, 0.00390625
        %v254 = vmul.f32 %v250, 0.00390625
        %v255 = vld [vmem:[%s1] sm:$0xff]
        %v256 = vld [vmem:[%s1 + $0x8] sm:$0xff]
        %v257 = vld [vmem:[%s1 + $0x10] sm:$0xff]
        %v258 = vld [vmem:[%s1 + $0x18] sm:$0xff]
        %v259 = vmul.f32 %v255, %v251
        %v260 = vmul.f32 %v256, %v252
        %v261 = vmul.f32 %v257, %v253
        %v262 = vmul.f32 %v258, %v254
        %v263 = vadd.f32 %v259, %v260
        %v264 = vadd.f32 %v263, %v261
        %v265 = vadd.f32 %v264, %v262
        %v266 = vrot.slane %v265, 4
        %v267 = vadd.f32 %v265, %v266
        %v268 = vrot.slane %v267, 2
        %v269 = vadd.f32 %v267, %v268
        %v270 = vrot.slane %v269, 1
        %v271 = vadd.f32 %v269, %v270
        %v272 = vmax.f32 %v271, 0.0
        %v273 = vld [vmem:[#allocation5] sm:$0xff]
        %v274 = vld [vmem:[#allocation5 + $0x8] sm:$0xff]
        %v275 = vld [vmem:[#allocation5 + $0x10] sm:$0xff]
        %v276 = vld [vmem:[#allocation5 + $0x18] sm:$0xff]
        %v277 = vmul.f32 %v273, %v272
        %v278 = vmul.f32 %v274, %v272
        %v279 = vmul.f32 %v275, %v272
        %v280 = vmul.f32 %v276, %v272
        %281 = vadd.xlane.f32.xlu0 %v277
        %v282 = vpop.xlane.xlu0 %281
        %283 = vadd.xlane.f32.xlu0 %v278
        %v284 = vpop.xlane.xlu0 %283
        %285 = vadd.xlane.f32.xlu0 %v279
        %v286 = vpop.xlane.xlu0 %285
        %287 = vadd.xlane.f32.xlu0 %v280
        %v288 = vpop.xlane.xlu0 %287
        %v289 = vxor.u32 %v282, 2147483648
        %v290 = vxor.u32 %v284, 2147483648
        %v291 = vxor.u32 %v286, 2147483648
        %v292 = vxor.u32 %v288, 2147483648
        %v293 = vmul.f32 %v289, 1.442695
        %v294 = vpow.pop %v293
        %v295 = vmul.f32 %v290, 1.442695
        %v296 = vpow.pop %v295
        %v297 = vmul.f32 %v291, 1.442695
        %v298 = vpow.pop %v297
        %v299 = vmul.f32 %v292, 1.442695
        %v300 = vpow.pop %v299
        %v301 = vadd.f32 %v294, 1.0
        %v302 = vadd.f32 %v296, 1.0
        %v303 = vadd.f32 %v298, 1.0
        %v304 = vadd.f32 %v300, 1.0
        %v305 = vrcp.pop %v301
        %v306 = vmul.f32 1.0, %v305
        %v307 = vrcp.pop %v302
        %v308 = vmul.f32 1.0, %v307
        %v309 = vrcp.pop %v303
        %v310 = vmul.f32 1.0, %v309
        %v311 = vrcp.pop %v304
        %v312 = vmul.f32 1.0, %v311
        %v313 = vld [vmem:[%s3] sm:$0xff]
        %v314 = vld [vmem:[%s3 + $0x8] sm:$0xff]
        %v315 = vld [vmem:[%s3 + $0x10] sm:$0xff]
        %v316 = vld [vmem:[%s3 + $0x18] sm:$0xff]
        %318 = vset.pattern.permute.xlu0 0
        %319 = vperm.xlu0 %318, %v313
        %v320 = vpop.permute.xlu0 %319
        %323 = vset.pattern.permute.xlu0 0
        %324 = vperm.xlu0 %323, %v314
        %v325 = vpop.permute.xlu0 %324
        %328 = vset.pattern.permute.xlu0 0
        %329 = vperm.xlu0 %328, %v315
        %v330 = vpop.permute.xlu0 %329
        %333 = vset.pattern.permute.xlu0 0
        %334 = vperm.xlu0 %333, %v316
        %v335 = vpop.permute.xlu0 %334
        %v337 = vmul.f32 %v231, %v320
        %v338 = vmul.f32 %v232, %v320
        %v339 = vmul.f32 %v233, %v325
        %v340 = vmul.f32 %v234, %v325
        %v341 = vmul.f32 %v235, %v330
        %v342 = vmul.f32 %v236, %v330
        %v343 = vmul.f32 %v237, %v335
        %v344 = vmul.f32 %v238, %v335
        %v345 = vadd.f32 %v337, %v339
        %v346 = vadd.f32 %v345, %v341
        %v347 = vadd.f32 %v346, %v343
        %v348 = vrot.slane %v347, 4
        %v349 = vadd.f32 %v347, %v348
        %v350 = vrot.slane %v349, 2
        %v351 = vadd.f32 %v349, %v350
        %v352 = vrot.slane %v351, 1
        %v353 = vadd.f32 %v351, %v352
        %v354 = vadd.f32 %v338, %v340
        %v355 = vadd.f32 %v354, %v342
        %v356 = vadd.f32 %v355, %v344
        %v357 = vrot.slane %v356, 4
        %v358 = vadd.f32 %v356, %v357
        %v359 = vrot.slane %v358, 2
        %v360 = vadd.f32 %v358, %v359
        %v361 = vrot.slane %v360, 1
        %v362 = vadd.f32 %v360, %v361
        %v363 = vxor.u32 %v353, 2147483648
        %v364 = vxor.u32 %v362, 2147483648
        %v365 = vmul.f32 %v363, 1.442695
        %v366 = vpow.pop %v365
        %v367 = vmul.f32 %v364, 1.442695
        %v368 = vpow.pop %v367
        %v369 = vadd.f32 %v366, 1.0
        %v370 = vadd.f32 %v368, 1.0
        %v371 = vrcp.pop %v369
        %v372 = vmul.f32 1.0, %v371
        %v373 = vrcp.pop %v370
        %v374 = vmul.f32 1.0, %v373
        %v375 = vmul.f32 %v372, 0.5
        %v376 = vmul.f32 %v374, 0.5
        %v377 = vadd.f32 %v306, %v375
        %v378 = vadd.f32 %v306, %v376
        %v379 = vadd.f32 %v308, %v375
        %v380 = vadd.f32 %v308, %v376
        %v381 = vadd.f32 %v310, %v375
        %v382 = vadd.f32 %v310, %v376
        %v383 = vadd.f32 %v312, %v375
        %v384 = vadd.f32 %v312, %v376
        %v385 = vmul.f32 %v231, %v377
        %v386 = vmul.f32 %v232, %v378
        %v387 = vmul.f32 %v233, %v379
        %v388 = vmul.f32 %v234, %v380
        %v389 = vmul.f32 %v235, %v381
        %v390 = vmul.f32 %v236, %v382
        %v391 = vmul.f32 %v237, %v383
        %v392 = vmul.f32 %v238, %v384
        %393 = vst [vmem:[%s230] sm:$0xff] %v385
        %394 = vst [vmem:[%s230 + $0x8] sm:$0xff] %v386
        %395 = vst [vmem:[%s230 + $0x10] sm:$0xff] %v387
        %396 = vst [vmem:[%s230 + $0x18] sm:$0xff] %v388
        %397 = vst [vmem:[%s230 + $0x20] sm:$0xff] %v389
        %398 = vst [vmem:[%s230 + $0x28] sm:$0xff] %v390
        %399 = vst [vmem:[%s230 + $0x30] sm:$0xff] %v391
        %400 = vst [vmem:[%s230 + $0x38] sm:$0xff] %v392
        %s401 = sand.u32 %s119, 1
        %s402 = scalar_lea.sflag [#allocation4], %s401
        %s403 = sand.u32 %s119, 1
        %s404 = smul.addr %s403, 64
        %s405 = scalar_lea.vmem [#allocation7], %s404
        // Predicated region
        $region45: #{tpu_custom_call.1} parent=35 // pred_check
          %p406 = pneg %p129
        $region46: #{tpu_custom_call.1} parent=35 // pred_check_branch
          %408 = sbr.rel (%p406) target = $region48
        $region47: #{tpu_custom_call.1} parent=35 // pred_region
          %s410 = ssub.s32 1024, 1024
          %411 = vsyncadd %s402, %s410
          %s412 = smul.addr %s22, 8
          %s413 = smul.addr %s412, 128
          %s414 = scalar_lea.hbm %s4, %s413
          %s415 = sshll.u32 %s405, 4
          %s416 = int_to_ptr.vmem [resolvable:$true] %s415
          %421 = dma.vmem_to_hbm [thread:$0]  %s416, 1024, %s414, %s402, 256, 256, 16
        $region48: #{tpu_custom_call.1} parent=35 // pred_fallthru
          _
      $region36: #{tpu_custom_call.1} parent=5 // pred_fallthru
        _
      %p422 = scmp.le.s32.totalorder 2, %s17
      // Predicated region
      $region49: #{tpu_custom_call.1} parent=5 // pred_check
        %p423 = pneg %p422
      $region50: #{tpu_custom_call.1} parent=5 // pred_check_branch
        %425 = sbr.rel (%p423) target = $region52
      $region51: #{tpu_custom_call.1} parent=5 // pred_region
        %s426 = ssub.s32 %s17, 2
        // Predicated region
        $region53: #{tpu_custom_call.1} parent=51 // pred_check
          %p427 = pneg %p135
        $region54: #{tpu_custom_call.1} parent=51 // pred_check_branch
          %429 = sbr.rel (%p427) target = $region56
        $region55: #{tpu_custom_call.1} parent=51 // pred_region
          %s430 = sand.u32 %s120, 1
          %s431 = scalar_lea.sflag [#allocation4], %s430
          %s432 = sand.u32 %s120, 1
          %s433 = smul.addr %s432, 64
          %s434 = scalar_lea.vmem [#allocation7], %s433
          %435 = dma.done %s431, 1024
        $region56: #{tpu_custom_call.1} parent=51 // pred_fallthru
          _
      $region52: #{tpu_custom_call.1} parent=5 // pred_fallthru
        _
    $region6: #{tpu_custom_call.1} parent=1 // loop_footer
      %s21 = sadd.s32 1, %s17
    $region7: #{tpu_custom_call.1} parent=1 // loop_footer_branch
      %16 = sbr.rel target = $region3
    $region8: #{tpu_custom_call.1} parent=1 // loop_exit
      _
    %436 = vsyncpa [#allocation3], 1
    %s437 = scalar_lea.sflag [#allocation3], 1
    %438 = vsyncpa %s437, 1
    %439 = vsyncpa [#allocation6], 1
    %440 = vsyncpa [#allocation4], 1
    %s441 = scalar_lea.sflag [#allocation4], 1
    %442 = vsyncpa %s441, 1

</llo_original>
